<compile_context>
chip_gen: v5e
topology: v5e:2x2
jax: 0.10.0
libtpu: 0.0.40
codegen_flags: <defaults>
</compile_context>

<pallas_src>
import functools
import math

import jax
import jax.numpy as jnp
from jax.experimental import pallas as pl
from jax.experimental.pallas import tpu as pltpu


def _round_up(v, m):
    return ((v + m - 1) // m) * m


def _gem_kernel(p_ref, x_ref, o_ref, acc_ref, *, eps, hw_true, tile_hw,
                need_mask, p_static):
    """One (row-tile, hw-tile) grid step of GeM pooling.

    p_ref   : (1,)  f32 SMEM   — learned exponent p (unused if p_static)
    x_ref   : (T, tile_hw) VMEM — input tile of the flattened (N*C, H*W) slab
    o_ref   : (1, T) VMEM       — lane-dense pooled output for this row tile
    acc_ref : (T, 1) f32 VMEM   — running sum of x**p over the HW axis
    """
    k = pl.program_id(1)

    @pl.when(k == 0)
    def _init():
        acc_ref[...] = jnp.zeros_like(acc_ref)

    x = x_ref[...].astype(jnp.float32)
    xc = jnp.maximum(x, eps)                    # clamp(min=eps), eps > 0

    if p_static is not None:
        # Static small-integer p: pure VPU (no per-element transcendentals).
        xp = xc
        for _ in range(p_static - 1):
            xp = xp * xc
    else:
        p = p_ref[0]
        xp = jnp.exp(p * jnp.log(xc))           # x ** p, x > 0 by the clamp

    if need_mask:
        # Last HW tile may extend past the true spatial size (wrapper pads);
        # zero the pad lanes so they do not contribute to the sum.
        hw_idx = k * tile_hw + jax.lax.broadcasted_iota(jnp.int32, xp.shape, 1)
        xp = jnp.where(hw_idx < hw_true, xp, 0.0)

    acc_ref[...] += jnp.sum(xp, axis=-1, keepdims=True)   # (T, 1)

    @pl.when(k == pl.num_programs(1) - 1)
    def _finalize():
        # Relayout once (T,1)->(1,T), THEN run the tiny log/exp epilogue on the
        # lane-dense vector; fold the 1/HW of the mean into the exponent.
        s = acc_ref[...].reshape(o_ref.shape)
        if p_static is not None:
            inv_p = 1.0 / float(p_static)
        else:
            inv_p = 1.0 / p_ref[0]
        log_hw = math.log(float(hw_true))
        pooled = jnp.exp(inv_p * (jnp.log(s) - log_hw))    # (sum/HW) ** (1/p)
        o_ref[...] = pooled.astype(o_ref.dtype)


def gem(x, p, eps=1e-6):
    """GeM pooling.  x: (N, C, H, W) -> (N, C).  Matches the PyTorch module."""
    if eps <= 0:
        # exp(p*log(x)) needs x > 0, which the clamp only guarantees for eps > 0.
        raise ValueError("GeM Pallas kernel requires eps > 0")

    N, C, H, W = x.shape
    NC, HW = N * C, H * W
    xr = x.reshape(NC, HW)                      # contiguous NCHW -> free reshape
    itemsize = jnp.dtype(x.dtype).itemsize

    # Static-p fast path only when p is a trace-time Python scalar with a small
    # integer value (e.g. the ubiquitous p=3).  The learned nn.Parameter path
    # (array p) uses the general exp/log formulation.
    p_static = None
    if isinstance(p, (int, float)) and not isinstance(p, bool):
        if float(p) == float(int(p)) and 1 <= int(p) <= 4:
            p_static = int(p)

    # ---- Tile sizing (generation-safe) -------------------------------------
    # Budget for the double-buffered input tiles, computed against the
    # lane-padded width so the VMEM estimate is honest for HW like 49/196.
    BUDGET_IN = 20 * 1024 * 1024
    MAX_ROWS = 4096

    lane_hw = _round_up(HW, 128)
    rows_full = BUDGET_IN // (2 * lane_hw * itemsize)

    if rows_full >= 128:
        # Full spatial extent fits per row: single HW tile, tile the row axis.
        tile_hw, hw_pad, num_hw, need_mask = HW, HW, 1, False
        rows_cap = min(MAX_ROWS, (rows_full // 128) * 128)
    else:
        # Very large HW: add a reduction grid axis over HW so every tile stays
        # pipelined and bounded (no scoped-VMEM blowup on any generation).
        tile_hw = min(lane_hw,
                      max(128, (BUDGET_IN // (2 * 128 * itemsize)) // 128 * 128))
        hw_pad = _round_up(HW, tile_hw)
        num_hw = hw_pad // tile_hw
        need_mask = hw_pad != HW
        rows_cap = 128

    if NC <= rows_cap:
        if NC >= 256:
            # Guarantee >= 2 row tiles so both v7x TensorCores get work.
            tile_rows = _round_up(-(-NC // 2), 128)
        else:
            tile_rows = _round_up(NC, 16)       # single tile == full padded array
    else:
        tile_rows = rows_cap

    nc_pad = _round_up(NC, tile_rows)
    num_row_tiles = nc_pad // tile_rows

    if nc_pad != NC or hw_pad != HW:
        # Pad rows/lanes with 1.0: padded rows yield finite junk that is sliced
        # off; padded HW lanes are masked out in-kernel (need_mask).
        xr = jnp.pad(xr, ((0, nc_pad - NC), (0, hw_pad - HW)),
                     constant_values=1.0)

    p_arr = jnp.asarray(p, jnp.float32).reshape(1)

    elems = nc_pad * hw_pad
    cost = pl.CostEstimate(
        flops=4 * elems,                                   # clamp+mul+mask+add
        transcendentals=(2 * elems) if p_static is None else 2 * nc_pad,
        bytes_accessed=elems * itemsize + nc_pad * itemsize,
    )

    out = pl.pallas_call(
        functools.partial(_gem_kernel, eps=float(eps), hw_true=HW,
                          tile_hw=tile_hw, need_mask=need_mask,
                          p_static=p_static),
        out_shape=jax.ShapeDtypeStruct((1, nc_pad), x.dtype),
        grid=(num_row_tiles, num_hw),
        in_specs=[
            pl.BlockSpec(memory_space=pltpu.MemorySpace.SMEM),       # p scalar
            pl.BlockSpec((tile_rows, tile_hw), lambda i, k: (i, k)),  # x tile
        ],
        out_specs=pl.BlockSpec((1, tile_rows), lambda i, k: (0, i)),  # lane-dense
        scratch_shapes=[pltpu.VMEM((tile_rows, 1), jnp.float32)],     # sum acc
        compiler_params=pltpu.CompilerParams(
            dimension_semantics=("parallel", "arbitrary"),
            vmem_limit_bytes=28 * 1024 * 1024,   # > v5e default, < v7x physical
        ),
        cost_estimate=cost,
    )(p_arr, xr)

    return out[0, :NC].reshape(N, C)


def gem_ref(x, p, eps=1e-6):
    """Pure-JAX reference matching the PyTorch forward."""
    p = jnp.asarray(p, jnp.float32).reshape(())
    xc = jnp.maximum(x.astype(jnp.float32), eps)
    pooled = jnp.mean(xc ** p, axis=(-2, -1))
    return (pooled ** (1.0 / p)).astype(x.dtype)


if __name__ == "__main__":
    key = jax.random.PRNGKey(0)
    k0, k1, k2 = jax.random.split(key, 3)

    # Parameter init matches nn.Parameter(torch.ones(1) * p) with p=3.
    p_param = jnp.ones((1,), jnp.float32) * 3.0

    # Main case (matches declared input shape).
    N, C, H, W = 2, 4, 16, 16
    x = jax.random.uniform(k0, (N, C, H, W), dtype=jnp.float32)
    out = jax.block_until_ready(gem(x, p_param, eps=1e-6))
    ref = gem_ref(x, p_param, eps=1e-6)
    assert out.shape == (N, C), out.shape
    assert jnp.allclose(out, ref, atol=1e-4, rtol=1e-4), (out, ref)

    # HW not a multiple of 128 (7x7, the typical classifier-head case):
    # exercises the masked lane-padded reduction.
    x2 = jax.random.uniform(k1, (2, 4, 7, 7), dtype=jnp.float32)
    out2 = jax.block_until_ready(gem(x2, p_param, eps=1e-6))
    ref2 = gem_ref(x2, p_param, eps=1e-6)
    assert jnp.allclose(out2, ref2, atol=1e-4, rtol=1e-4), (out2, ref2)

    # Large-HW path: HW reduction grid axis + accumulator + pad-lane mask.
    x3 = jax.random.uniform(k2, (2, 4, 160, 160), dtype=jnp.float32)
    out3 = jax.block_until_ready(gem(x3, p_param, eps=1e-6))
    ref3 = gem_ref(x3, p_param, eps=1e-6)
    assert jnp.allclose(out3, ref3, atol=1e-4, rtol=1e-4), (out3, ref3)

    print("KERNEL_OK")
</pallas_src>

<mosaic_0001>
module attributes {stable_mosaic.version = 11 : i64} {
  func.func @_gem_kernel(%arg0: i32, %arg1: i32, %arg2: memref<1xf32, #tpu.memory_space<smem>>, %arg3: memref<16x256xf32, #tpu.memory_space<vmem>>, %arg4: memref<1x16xf32, #tpu.memory_space<vmem>>, %arg5: memref<16x1xf32, #tpu.memory_space<vmem>>) attributes {dimension_semantics = [#tpu.dimension_semantics<parallel>, #tpu.dimension_semantics<arbitrary>], iteration_bounds = array<i64: 1, 1>, scalar_prefetch = 0 : i64, scratch_operands = 1 : i64, tpu.core_type = #tpu.core_type<tc>, window_params = [{transform_indices = @transform_0, window_bounds = array<i64: 1>}, {transform_indices = @transform_1, window_bounds = array<i64: 16, 256>}, {transform_indices = @transform_2, window_bounds = array<i64: 1, 16>}]} {
    %c0_i32 = arith.constant 0 : i32
    %0 = arith.cmpi eq, %arg1, %c0_i32 : i32
    %1 = arith.extui %0 : i1 to i32
    %c0_i32_0 = arith.constant 0 : i32
    %2 = arith.cmpi ne, %1, %c0_i32_0 : i32
    scf.if %2 {
      %cst_10 = arith.constant 0.000000e+00 : f32
      %19 = vector.broadcast %cst_10 : f32 to vector<16x1xf32>
      %c0_11 = arith.constant 0 : index
      %c0_12 = arith.constant 0 : index
      %20 = vector.load %arg5[%c0_11, %c0_12] : memref<16x1xf32, #tpu.memory_space<vmem>>, vector<16x1xf32>
      tpu.vector_store %arg5[%c0_11, %c0_12], %19 {strides = array<i32>} : memref<16x1xf32, #tpu.memory_space<vmem>>, vector<16x1xf32>,
    } else {
    }
    %c0 = arith.constant 0 : index
    %c0_1 = arith.constant 0 : index
    %3 = vector.load %arg3[%c0, %c0_1] : memref<16x256xf32, #tpu.memory_space<vmem>>, vector<16x256xf32>
    %cst = arith.constant 9.99999997E-7 : f32
    %4 = vector.broadcast %cst : f32 to vector<16x256xf32>
    %5 = arith.maximumf %3, %4 : vector<16x256xf32>
    %c0_2 = arith.constant 0 : index
    %6 = memref.load %arg2[%c0_2] : memref<1xf32, #tpu.memory_space<smem>>
    %7 = math.log %5 : vector<16x256xf32>
    %8 = vector.broadcast %6 : f32 to vector<16x256xf32>
    %9 = arith.mulf %8, %7 : vector<16x256xf32>
    %10 = math.exp %9 : vector<16x256xf32>
    %c0_3 = arith.constant 0 : index
    %c0_4 = arith.constant 0 : index
    %11 = vector.load %arg5[%c0_3, %c0_4] : memref<16x1xf32, #tpu.memory_space<vmem>>, vector<16x1xf32>
    %cst_5 = arith.constant dense<0.000000e+00> : vector<16xf32>
    %12 = vector.multi_reduction <add>, %10, %cst_5 [1] : vector<16x256xf32> to vector<16xf32>
    %13 = vector.shape_cast %12 : vector<16xf32> to vector<16x1xf32>
    %14 = arith.addf %11, %13 : vector<16x1xf32>
    %c0_6 = arith.constant 0 : index
    %c0_7 = arith.constant 0 : index
    %15 = vector.load %arg5[%c0_6, %c0_7] : memref<16x1xf32, #tpu.memory_space<vmem>>, vector<16x1xf32>
    tpu.vector_store %arg5[%c0_6, %c0_7], %14 {strides = array<i32>} : memref<16x1xf32, #tpu.memory_space<vmem>>, vector<16x1xf32>,
    %c0_i32_8 = arith.constant 0 : i32
    %16 = arith.cmpi eq, %arg1, %c0_i32_8 : i32
    %17 = arith.extui %16 : i1 to i32
    %c0_i32_9 = arith.constant 0 : i32
    %18 = arith.cmpi ne, %17, %c0_i32_9 : i32
    scf.if %18 {
      %c0_10 = arith.constant 0 : index
      %c0_11 = arith.constant 0 : index
      %19 = vector.load %arg5[%c0_10, %c0_11] : memref<16x1xf32, #tpu.memory_space<vmem>>, vector<16x1xf32>
      %20 = vector.shape_cast %19 : vector<16x1xf32> to vector<1x16xf32>
      %c0_12 = arith.constant 0 : index
      %21 = memref.load %arg2[%c0_12] : memref<1xf32, #tpu.memory_space<smem>>
      %cst_13 = arith.constant 1.000000e+00 : f32
      %22 = arith.divf %cst_13, %21 : f32
      %23 = math.log %20 : vector<1x16xf32>
      %cst_14 = arith.constant 5.54517746 : f32
      %24 = vector.broadcast %cst_14 : f32 to vector<1x16xf32>
      %25 = arith.subf %23, %24 : vector<1x16xf32>
      %26 = vector.broadcast %22 : f32 to vector<1x16xf32>
      %27 = arith.mulf %26, %25 : vector<1x16xf32>
      %28 = math.exp %27 : vector<1x16xf32>
      %c0_15 = arith.constant 0 : index
      %c0_16 = arith.constant 0 : index
      %29 = vector.load %arg4[%c0_15, %c0_16] : memref<1x16xf32, #tpu.memory_space<vmem>>, vector<1x16xf32>
      tpu.vector_store %arg4[%c0_15, %c0_16], %28 {strides = array<i32>} : memref<1x16xf32, #tpu.memory_space<vmem>>, vector<1x16xf32>,
    } else {
    }
    return
  }
  func.func @transform_0(%arg0: i32, %arg1: i32) -> i32 {
    %c0_i32 = arith.constant 0 : i32
    %c0_i32_0 = arith.constant 0 : i32
    return %c0_i32 : i32
  }
  func.func @transform_1(%arg0: i32, %arg1: i32) -> (i32, i32) {
    %c0_i32 = arith.constant 0 : i32
    return %arg0, %arg1 : i32, i32
  }
  func.func @transform_2(%arg0: i32, %arg1: i32) -> (i32, i32) {
    %c0_i32 = arith.constant 0 : i32
    %c0_i32_0 = arith.constant 0 : i32
    return %c0_i32, %arg0 : i32, i32
  }
}

</mosaic_0001>

<llo_original>
// kernel: tpu_custom_call.1
$region0: #{tpu_custom_call.1}
  #allocation0 [shape = 'u32[]', space=smem, size = 0x4, offset = 0x4, fixed_abs, tag = 'smem constant byte address 0x4 - core index']
  #allocation1 [shape = 'u32[72,128]{1,0:T(1,128)}', space=vmem, size = 0x9000, scoped, tag = 'internal scratch']
  #allocation2 [shape = 'f32[16,1]{1,0:T(8,128)}', space=vmem, size = 0x2000, scoped, tag = 'scratch operand']
  #allocation3 [shape = 'f32[1]{0:T(128)S(6)}', space=smem, size = 0x200, scoped, tag = 'scoped memory for tpu_custom_call.1']
  %s0 = inlined_call_operand.<no memory space> [shape: f32[1], index: 0, kind: input, shape index: {}]
  %s1 = inlined_call_operand.hbm [shape: f32[16,256], index: 1, kind: input, shape index: {}]
  %s2 = inlined_call_operand.hbm [shape: f32[1,16], index: 2, kind: output, shape index: {}]
  %s3 = sld [smem:[#allocation0]]
  $region30: #{tpu_custom_call.1} parent=0
    _
  %s5 = ssub.s32 1, %s3
  %s6 = scalar_select 0, %s5, %s3
  %7 = sst [smem:[#allocation3]] %s0
  $region1: #{tpu_custom_call.1} parent=0
    #allocation4 [shape = 'u8[16384]{0}', space=vmem, size = 0x4000, scoped, tag = 'input window, operand 1, single buffered']
    #allocation5 [shape = 's32[1]{0}', space=sflag, size = 0x4, scoped, tag = 'scoped memory for tpu_custom_call.1']
    #allocation6 [shape = 's32[1]{0}', space=sflag, size = 0x4, scoped, tag = 'scoped memory for tpu_custom_call.1']
    #allocation7 [shape = 'u8[512]{0}', space=vmem, size = 0x400, scoped, tag = 'output window, operand 0, single buffered']
    %8 = vsyncpa [#allocation5], 0
    %9 = vsyncpa [#allocation6], 0
    // Predicated region
    $region2: #{tpu_custom_call.1} parent=1 // pred_check
      _
    $region3: #{tpu_custom_call.1} parent=1 // pred_check_branch
      %11 = sbr.rel (0) target = $region5
    $region4: #{tpu_custom_call.1} parent=1 // pred_region
      _
    $region5: #{tpu_custom_call.1} parent=1 // pred_fallthru
      _
    // Predicated region
    $region6: #{tpu_custom_call.1} parent=1 // pred_check
      _
    $region7: #{tpu_custom_call.1} parent=1 // pred_check_branch
      %13 = sbr.rel (0) target = $region9
    $region8: #{tpu_custom_call.1} parent=1 // pred_region
      %15 = vsyncadd [#allocation5], 0
      %s16 = sshll.u32 %s1, 4
      %s17 = int_to_ptr.hbm [resolvable:$true] %s16
      %s18 = sshll.u32 [#allocation4], 4
      %s19 = int_to_ptr.vmem [resolvable:$true] %s18
      %24 = dma.hbm_to_vmem [thread:$0]  %s17, 512, %s19, [#allocation5], 256, 256, 16
    $region9: #{tpu_custom_call.1} parent=1 // pred_fallthru
      _
    // Predicated region
    $region10: #{tpu_custom_call.1} parent=1 // pred_check
      _
    $region11: #{tpu_custom_call.1} parent=1 // pred_check_branch
      %26 = sbr.rel (0) target = $region13
    $region12: #{tpu_custom_call.1} parent=1 // pred_region
      %28 = dma.done [#allocation5], 512
    $region13: #{tpu_custom_call.1} parent=1 // pred_fallthru
      _
    %p29 = scmp.eq.s32.totalorder 0, 0
    // Predicated region
    $region14: #{tpu_custom_call.1} parent=1 // pred_check
      %p30 = pneg %p29
    $region15: #{tpu_custom_call.1} parent=1 // pred_check_branch
      %32 = sbr.rel (%p30) target = $region17
    $region16: #{tpu_custom_call.1} parent=1 // pred_region
      %vm33 = vcmask 7168
      %34 = vst.msk [vmem:[#allocation2] sm:$0xff] %vm33, 0.0
      %35 = vst.msk [vmem:[#allocation2 + $0x8] sm:$0xff] %vm33, 0.0
    $region17: #{tpu_custom_call.1} parent=1 // pred_fallthru
      _
    %v36 = vld [vmem:[#allocation4] sm:$0xff]
    %v37 = vld [vmem:[#allocation4 + $0x8] sm:$0xff]
    %v38 = vld [vmem:[#allocation4 + $0x10] sm:$0xff]
    %v39 = vld [vmem:[#allocation4 + $0x18] sm:$0xff]
    %v40 = vmax.f32 %v36, 1e-06
    %v41 = vmax.f32 %v37, 1e-06
    %v42 = vmax.f32 %v38, 1e-06
    %v43 = vmax.f32 %v39, 1e-06
    %s44 = sld [smem:[#allocation3]]
    %v45 = vlog2.pop %v40
    %v46 = vmul.f32 %v45, 0.6931472
    %v47 = vlog2.pop %v41
    %v48 = vmul.f32 %v47, 0.6931472
    %v49 = vlog2.pop %v42
    %v50 = vmul.f32 %v49, 0.6931472
    %v51 = vlog2.pop %v43
    %v52 = vmul.f32 %v51, 0.6931472
    %v53 = vstv %s44
    %v54 = vmul.f32 %v53, %v46
    %v55 = vmul.f32 %v53, %v48
    %v56 = vmul.f32 %v53, %v50
    %v57 = vmul.f32 %v53, %v52
    %v58 = vmul.f32 %v54, 1.442695
    %v59 = vpow.pop %v58
    %v60 = vmul.f32 %v55, 1.442695
    %v61 = vpow.pop %v60
    %v62 = vmul.f32 %v56, 1.442695
    %v63 = vpow.pop %v62
    %v64 = vmul.f32 %v57, 1.442695
    %v65 = vpow.pop %v64
    %v66 = vld [vmem:[#allocation2] sm:$0xff]
    %v67 = vld [vmem:[#allocation2 + $0x8] sm:$0xff]
    %v68 = vadd.f32 %v59, %v61
    %69 = vadd.xlane.f32.xlu0 %v68
    %v70 = vpop.xlane.xlu0 %69
    %v71 = vadd.f32 %v63, %v65
    %72 = vadd.xlane.f32.xlu0 %v71
    %v73 = vpop.xlane.xlu0 %72
    %v74 = vadd.f32 %v66, %v70
    %v75 = vadd.f32 %v67, %v73
    %vm76 = vcmask 7168
    %77 = vst.msk [vmem:[#allocation2] sm:$0xff] %vm76, %v74
    %78 = vst.msk [vmem:[#allocation2 + $0x8] sm:$0xff] %vm76, %v75
    // Predicated region
    $region18: #{tpu_custom_call.1} parent=1 // pred_check
      %p79 = pneg %p29
    $region19: #{tpu_custom_call.1} parent=1 // pred_check_branch
      %81 = sbr.rel (%p79) target = $region21
    $region20: #{tpu_custom_call.1} parent=1 // pred_region
      %v82 = vld [vmem:[#allocation2] sm:$0xff]
      %v83 = vld [vmem:[#allocation2 + $0x8] sm:$0xff]
      %s84 = sld [smem:[#allocation3]]
      %v85 = vstv %s84
      %v86 = vrcp.pop %v85
      %v87 = vmul.f32 %v85, %v86
      %v88 = vsub.f32 1.0, %v87
      %v89 = vmul.f32 %v86, %v88
      %v90 = vadd.f32 %v86, %v89
      %vm91 = vweird.f32 %v85
      %vm92 = vweird.f32 %v86
      %vm93 = vmor %vm91, %vm92
      %v94 = vsel %vm93, %v86, %v90
      %v95 = vand.u32 2147483647, %v85
      %vm96 = vcmp.eq.f32.partialorder %v95, 8.507059e+37
      %v97 = vand.u32 %v85, 2147483648
      %v98 = vor.u32 1.1754944e-38, %v97
      %v99 = vsel %vm96, %v98, %v94
      %s100 = vtos %v99
      %v101 = vlog2.pop %v82
      %v102 = vmul.f32 %v101, 0.6931472
      %v103 = vlog2.pop %v83
      %v104 = vmul.f32 %v103, 0.6931472
      %v105 = vsub.f32 %v102, 5.5451775
      %v106 = vsub.f32 %v104, 5.5451775
      %v107 = vstv %s100
      %v108 = vmul.f32 %v107, %v105
      %v109 = vmul.f32 %v107, %v106
      %v110 = vmul.f32 %v108, 1.442695
      %v111 = vpow.pop %v110
      %v112 = vmul.f32 %v109, 1.442695
      %v113 = vpow.pop %v112
      %116 = vset.pattern.permute.xlu0 0
      %117 = vperm.xlu0 %116, %v111
      %v118 = vpop.permute.xlu0 %117
      %119 = vset.pattern.permute.xlu0 0
      %120 = vperm.xlu0 %119, %v113
      %v121 = vpop.permute.xlu0 %120
      %v122 = vlaneseq
      %v123 = vand.u32 %v122, 127
      %v124 = vperm.slane %v118, %v123
      %v125 = vadd.s32 %v123, 4294967288
      %v126 = vperm.slane %v121, %v125
      %vm127 = vcmask 130112
      %v128 = vsel %vm127, %v126, %v124
      %vm130 = vcmask 122880
      %131 = vst.msk [vmem:[#allocation7] sm:$0x1] %vm130, %v128
    $region21: #{tpu_custom_call.1} parent=1 // pred_fallthru
      _
    // Predicated region
    $region22: #{tpu_custom_call.1} parent=1 // pred_check
      _
    $region23: #{tpu_custom_call.1} parent=1 // pred_check_branch
      %133 = sbr.rel (0) target = $region25
    $region24: #{tpu_custom_call.1} parent=1 // pred_region
      %135 = vsyncadd [#allocation6], 0
      %s137 = sshll.u32 [#allocation7], 4
      %s138 = int_to_ptr.vmem [resolvable:$true] %s137
      %s139 = sshll.u32 %s2, 4
      %s140 = int_to_ptr.hbm [resolvable:$true] %s139
      %142 = dma.vmem_to_hbm [thread:$0]  %s138, 16, %s140, [#allocation6]
    $region25: #{tpu_custom_call.1} parent=1 // pred_fallthru
      _
    // Predicated region
    $region26: #{tpu_custom_call.1} parent=1 // pred_check
      _
    $region27: #{tpu_custom_call.1} parent=1 // pred_check_branch
      %144 = sbr.rel (0) target = $region29
    $region28: #{tpu_custom_call.1} parent=1 // pred_region
      %146 = dma.done [#allocation6], 16
    $region29: #{tpu_custom_call.1} parent=1 // pred_fallthru
      _
    %147 = vsyncpa [#allocation5], 1
    %148 = vsyncpa [#allocation6], 1

</llo_original>
